<compile_context>
chip_gen: v5e
topology: v5e:2x2
jax: 0.10.0
libtpu: 0.0.40
codegen_flags: <defaults>
</compile_context>

<pallas_src>
import jax
import jax.numpy as jnp
from jax.experimental import pallas as pl
from jax.experimental.pallas import tpu as pltpu


LANE = 128
MAX_BLOCK_BYTES = 2 * 1024 * 1024   # per x block; v5e-safe with double buffering
MAX_TILE_SAMPLES = 256              # bound the (tile_n, 3, 128) params VMEM buffer


def _round_up(v, m):
    return ((v + m - 1) // m) * m


# ----------------------------------------------------------------------------
# Pallas kernel: single-path PAMS quantization with per-sample parameters.
# ----------------------------------------------------------------------------
def _bitselector_kernel(p_ref, x_ref, out_ref):
    """p_ref:  (tile_n, 3, 128) f32 -- sublane 0/1/2 = alpha / scale / inv_scale,
               each replicated across all 128 lanes.
       x_ref / out_ref: (tile_n, tile_r, 128) blocks of the flattened samples."""
    alpha = p_ref[:, 0:1, :]        # (tile_n, 1, 128) -> sublane broadcast below
    scale = p_ref[:, 1:2, :]
    inv_scale = p_ref[:, 2:3, :]

    x = x_ref[...].astype(jnp.float32)
    q = jnp.round(jnp.clip(x, -alpha, alpha) * scale) * inv_scale
    out_ref[...] = q.astype(out_ref.dtype)


# ----------------------------------------------------------------------------
# Wrapper (parameter prep + layout glue in plain JAX, hot loop in Pallas).
# ----------------------------------------------------------------------------
class BitSelectorPallas:
    def __init__(self, n_feats, search_space=(4, 6, 8)):
        self.search_space = tuple(search_space)
        n_branch = len(self.search_space)
        # quant_act_pams learnable clip parameters (PAMS-style init, one per
        # quantizer).  Kept as jnp arrays so updating them does NOT recompile
        # the Pallas kernel.
        self.alphas = jnp.full((n_branch,), 10.0, jnp.float32)
        # net_small: Linear(n_feats+2, n_branch); ones weight, bias zeros
        # except last = 1.  Defined for parity; unused in this forward.
        self.net_small_w = jnp.ones((n_branch, n_feats + 2), jnp.float32)
        self.net_small_b = jnp.zeros((n_branch,), jnp.float32).at[-1].set(1.0)
        # `flag` is set externally (like the PyTorch module).
        self.flag = None

    def __call__(self, inputs):
        grad = inputs[0]
        x = inputs[1]                       # (N, C, H, W)
        bits = inputs[2]
        take_index = inputs[3] if len(inputs) >= 4 and inputs[3] is not None else None

        N, C, H, W = x.shape
        if take_index is None:
            take_index = jnp.arange(N, dtype=jnp.int32)

        ss = self.search_space
        n_branch = len(ss)
        sel = jnp.asarray(self.flag)[take_index].astype(jnp.int32)        # (N,)

        # ---- bits accumulation (hard sum of selected bit widths) ----
        bits_hard = jnp.zeros_like(sel)
        for k in range(n_branch):
            bits_hard = bits_hard + (sel == k).astype(jnp.int32) * ss[k]
        if isinstance(bits, int):
            # PyTorch `bits += tensor` with a python-int bits also yields a tensor.
            bits_out = bits + bits_hard
        else:
            bits_out = bits.at[take_index].add(bits_hard)

        # ---- per-sample quantizer parameters (no recompile on alpha update) ----
        alphas = jnp.asarray(self.alphas, jnp.float32)                    # (n_branch,)
        qmax = jnp.array([2.0 ** (k - 1) - 1.0 for k in ss], jnp.float32)
        scales = qmax / alphas
        inv_scales = alphas / qmax
        valid = (sel >= 0) & (sel < n_branch)
        sel_c = jnp.clip(sel, 0, n_branch - 1)
        a_n = jnp.where(valid, alphas[sel_c], 0.0)                        # (N,)
        s_n = jnp.where(valid, scales[sel_c], 0.0)
        i_n = jnp.where(valid, inv_scales[sel_c], 0.0)
        params = jnp.stack([a_n, s_n, i_n], axis=1)                       # (N, 3)
        params = jnp.broadcast_to(params[:, :, None], (N, 3, LANE)).astype(jnp.float32)

        # ---- lane-dense layout: (N, R, 128); pad only when unavoidable ----
        D = C * H * W
        itemsize = jnp.dtype(x.dtype).itemsize
        sublane = {4: 8, 2: 16, 1: 32}.get(itemsize, 8)
        max_rows = max(sublane, MAX_BLOCK_BYTES // (LANE * itemsize))

        R = pl.cdiv(D, LANE)
        if D % LANE == 0:
            x3 = x.reshape(N, R, LANE)          # pure reshape, no HBM copy
            padded = False
        else:
            x_flat = x.reshape(N, D)
            x_flat = jnp.pad(x_flat, ((0, 0), (0, R * LANE - D)))   # minimal pad
            x3 = x_flat.reshape(N, R, LANE)
            padded = True

        # ---- tile selection: big blocks, multi-sample fusion for small D ----
        if R > max_rows:
            tile_n = 1
            grid_r = pl.cdiv(R, max_rows)
            tile_r = _round_up(pl.cdiv(R, grid_r), sublane)
            grid_r = pl.cdiv(R, tile_r)
        else:
            tile_r = R                          # full-sample rows (== dim, so ok)
            grid_r = 1
            tile_n = max(1, min(N, max_rows // max(R, 1), MAX_TILE_SAMPLES))
        grid_n = pl.cdiv(N, tile_n)

        # v7x megacore: guarantee >= 2 "parallel" grid steps whenever possible.
        if grid_n * grid_r < 2:
            if N >= 2:
                tile_n = pl.cdiv(N, 2)
                grid_n = pl.cdiv(N, tile_n)
            elif R >= 2 * sublane:
                tile_r = _round_up(pl.cdiv(R, 2), sublane)
                grid_r = pl.cdiv(R, tile_r)

        out3 = pl.pallas_call(
            _bitselector_kernel,
            out_shape=jax.ShapeDtypeStruct((N, R, LANE), x.dtype),
            grid=(grid_n, grid_r),
            in_specs=[
                pl.BlockSpec((tile_n, 3, LANE), lambda i, j: (i, 0, 0)),
                pl.BlockSpec((tile_n, tile_r, LANE), lambda i, j: (i, j, 0)),
            ],
            out_specs=pl.BlockSpec((tile_n, tile_r, LANE), lambda i, j: (i, j, 0)),
            compiler_params=pltpu.CompilerParams(
                dimension_semantics=("parallel", "parallel"),
            ),
        )(params, x3)

        if padded:
            residual = out3.reshape(N, R * LANE)[:, :D].reshape(N, C, H, W)
        else:
            residual = out3.reshape(N, C, H, W)   # pure reshape, no HBM copy

        return [grad, residual, bits_out]


# ----------------------------------------------------------------------------
# Pure-JAX reference (PyTorch hard-sum form, divide-by-scale dequant).
# ----------------------------------------------------------------------------
def _reference(x, sel, alphas, search_space):
    def q(v, alpha, k):
        qmax = 2.0 ** (k - 1) - 1.0
        scale = qmax / alpha
        return jnp.round(jnp.clip(v, -alpha, alpha) * scale) / scale

    out = jnp.zeros_like(x)
    for i in range(len(search_space)):
        m = (sel == i).astype(x.dtype)[:, None, None, None]
        out = out + m * q(x, alphas[i], search_space[i])
    return out


if __name__ == "__main__":
    key = jax.random.PRNGKey(0)
    k1, k2, k3, k4 = jax.random.split(key, 4)

    # ---- primary case: D = C*H*W multiple of 128 (no-pad / no-slice path) ----
    N, C, H, W = 2, 4, 16, 16
    x = jax.random.normal(k1, (N, C, H, W), jnp.float32) * 3.0
    grad = jax.random.normal(k2, (N, C, H, W), jnp.float32)
    bits = jnp.zeros((N,), jnp.int32)
    flag = jnp.array([0, 2], jnp.int32)

    mod = BitSelectorPallas(n_feats=C, search_space=(4, 6, 8))
    mod.flag = flag
    grad_out, residual, bits_out = mod([grad, x, bits, None])
    jax.block_until_ready(residual)

    assert grad_out.shape == (N, C, H, W)
    assert residual.shape == (N, C, H, W)
    ref = _reference(x, flag, mod.alphas, mod.search_space)
    assert jnp.allclose(residual, ref, atol=1e-5), "kernel mismatch vs reference"
    assert jnp.array_equal(bits_out, jnp.array([4, 8], jnp.int32))
    assert jnp.array_equal(grad_out, grad)

    # ---- multi-sample-per-block case (tile_n > 1, mixed flags in one block) ----
    N2 = 4
    x2 = jax.random.normal(k3, (N2, C, H, W), jnp.float32) * 3.0
    flag2 = jnp.array([2, 0, 1, 2], jnp.int32)
    mod.flag = flag2
    _, res2, bits2 = mod([x2, x2, jnp.zeros((N2,), jnp.int32), None])
    jax.block_until_ready(res2)
    assert jnp.allclose(res2, _reference(x2, flag2, mod.alphas, mod.search_space),
                        atol=1e-5), "multi-sample block mismatch"
    assert jnp.array_equal(bits2, jnp.array([8, 4, 6, 8], jnp.int32))

    # ---- padded + ragged case: D % 128 != 0, odd N (ragged leading block) ----
    N3, C3, H3, W3 = 3, 3, 5, 7
    x3 = jax.random.normal(k4, (N3, C3, H3, W3), jnp.float32) * 3.0
    flag3 = jnp.array([1, 2, 0], jnp.int32)
    mod3 = BitSelectorPallas(n_feats=C3)
    mod3.flag = flag3
    _, res3, bits3 = mod3([x3, x3, jnp.zeros((N3,), jnp.int32), None])
    jax.block_until_ready(res3)
    assert jnp.allclose(res3, _reference(x3, flag3, mod3.alphas, mod3.search_space),
                        atol=1e-5), "padded/ragged case mismatch"
    assert jnp.array_equal(bits3, jnp.array([6, 8, 4], jnp.int32))

    print("KERNEL_OK")
</pallas_src>

<mosaic_0001>
module attributes {stable_mosaic.version = 11 : i64} {
  func.func @_bitselector_kernel(%arg0: i32, %arg1: i32, %arg2: memref<1x3x128xf32, #tpu.memory_space<vmem>>, %arg3: memref<1x8x128xf32, #tpu.memory_space<vmem>>, %arg4: memref<1x8x128xf32, #tpu.memory_space<vmem>>) attributes {dimension_semantics = [#tpu.dimension_semantics<parallel>, #tpu.dimension_semantics<parallel>], iteration_bounds = array<i64: 2, 1>, scalar_prefetch = 0 : i64, scratch_operands = 0 : i64, tpu.core_type = #tpu.core_type<tc>, window_params = [{transform_indices = @transform_0, window_bounds = array<i64: 1, 3, 128>}, {transform_indices = @transform_1, window_bounds = array<i64: 1, 8, 128>}, {transform_indices = @transform_2, window_bounds = array<i64: 1, 8, 128>}]} {
    %c0 = arith.constant 0 : index
    %c0_0 = arith.constant 0 : index
    %c0_1 = arith.constant 0 : index
    %0 = vector.load %arg2[%c0, %c0_0, %c0_1] : memref<1x3x128xf32, #tpu.memory_space<vmem>>, vector<1x1x128xf32>
    %c0_2 = arith.constant 0 : index
    %c1 = arith.constant 1 : index
    %c0_3 = arith.constant 0 : index
    %1 = vector.load %arg2[%c0_2, %c1, %c0_3] : memref<1x3x128xf32, #tpu.memory_space<vmem>>, vector<1x1x128xf32>
    %c0_4 = arith.constant 0 : index
    %c2 = arith.constant 2 : index
    %c0_5 = arith.constant 0 : index
    %2 = vector.load %arg2[%c0_4, %c2, %c0_5] : memref<1x3x128xf32, #tpu.memory_space<vmem>>, vector<1x1x128xf32>
    %c0_6 = arith.constant 0 : index
    %c0_7 = arith.constant 0 : index
    %c0_8 = arith.constant 0 : index
    %3 = vector.load %arg3[%c0_6, %c0_7, %c0_8] : memref<1x8x128xf32, #tpu.memory_space<vmem>>, vector<1x8x128xf32>
    %cst = arith.constant 0.000000e+00 : f32
    %4 = vector.broadcast %cst : f32 to vector<1x1x128xf32>
    %5 = arith.subf %4, %0 : vector<1x1x128xf32>
    %6 = vector.broadcast %5 : vector<1x1x128xf32> to vector<1x8x128xf32>
    %7 = arith.maximumf %6, %3 : vector<1x8x128xf32>
    %8 = vector.broadcast %0 : vector<1x1x128xf32> to vector<1x8x128xf32>
    %9 = arith.minimumf %8, %7 : vector<1x8x128xf32>
    %10 = vector.broadcast %1 : vector<1x1x128xf32> to vector<1x8x128xf32>
    %11 = arith.mulf %9, %10 : vector<1x8x128xf32>
    %12 = math.roundeven %11 : vector<1x8x128xf32>
    %13 = vector.broadcast %2 : vector<1x1x128xf32> to vector<1x8x128xf32>
    %14 = arith.mulf %12, %13 : vector<1x8x128xf32>
    %c0_9 = arith.constant 0 : index
    %c0_10 = arith.constant 0 : index
    %c0_11 = arith.constant 0 : index
    %15 = vector.load %arg4[%c0_9, %c0_10, %c0_11] : memref<1x8x128xf32, #tpu.memory_space<vmem>>, vector<1x8x128xf32>
    tpu.vector_store %arg4[%c0_9, %c0_10, %c0_11], %14 {strides = array<i32>} : memref<1x8x128xf32, #tpu.memory_space<vmem>>, vector<1x8x128xf32>,
    return
  }
  func.func @transform_0(%arg0: i32, %arg1: i32) -> (i32, i32, i32) {
    %c0_i32 = arith.constant 0 : i32
    %c0_i32_0 = arith.constant 0 : i32
    %c0_i32_1 = arith.constant 0 : i32
    return %arg0, %c0_i32, %c0_i32_0 : i32, i32, i32
  }
  func.func @transform_1(%arg0: i32, %arg1: i32) -> (i32, i32, i32) {
    %c0_i32 = arith.constant 0 : i32
    %c0_i32_0 = arith.constant 0 : i32
    return %arg0, %arg1, %c0_i32 : i32, i32, i32
  }
  func.func @transform_2(%arg0: i32, %arg1: i32) -> (i32, i32, i32) {
    %c0_i32 = arith.constant 0 : i32
    %c0_i32_0 = arith.constant 0 : i32
    return %arg0, %arg1, %c0_i32 : i32, i32, i32
  }
}

</mosaic_0001>

<llo_original>
// kernel: tpu_custom_call.1
$region0: #{tpu_custom_call.1}
  #allocation0 [shape = 'u32[]', space=smem, size = 0x4, offset = 0x4, fixed_abs, tag = 'smem constant byte address 0x4 - core index']
  #allocation1 [shape = 'u32[72,128]{1,0:T(1,128)}', space=vmem, size = 0x9000, scoped, tag = 'internal scratch']
  %s0 = inlined_call_operand.vmem [shape: f32[2,3,128], index: 0, kind: input, shape index: {}]
  %s1 = inlined_call_operand.hbm [shape: f32[2,8,128], index: 1, kind: input, shape index: {}]
  %s2 = inlined_call_operand.hbm [shape: f32[2,8,128], index: 2, kind: output, shape index: {}]
  %s3 = sld [smem:[#allocation0]]
  $region45: #{tpu_custom_call.1} parent=0
    _
  %s5 = ssub.s32 1, %s3
  %s6 = scalar_select 0, %s5, %s3
  $region1: #{tpu_custom_call.1} parent=0
    #allocation2 [shape = 'u8[8192]{0}', space=vmem, size = 0x2000, scoped, tag = 'input window, operand 1']
    #allocation3 [shape = 's32[2]{0}', space=sflag, size = 0x8, scoped, tag = 'scoped memory for tpu_custom_call.1']
    #allocation4 [shape = 's32[2]{0}', space=sflag, size = 0x8, scoped, tag = 'scoped memory for tpu_custom_call.1']
    #allocation5 [shape = 'u8[8192]{0}', space=vmem, size = 0x2000, scoped, tag = 'output window, operand 0']
    %7 = vsyncpa [#allocation3], 0
    %s8 = scalar_lea.sflag [#allocation3], 1
    %9 = vsyncpa %s8, 0
    %10 = vsyncpa [#allocation4], 0
    %s11 = scalar_lea.sflag [#allocation4], 1
    %12 = vsyncpa %s11, 0
    loop: start=0, step=1, limit=4
    $region2: #{tpu_custom_call.1} parent=1 // loop_pre_header
      _
    $region3: #{tpu_custom_call.1} parent=1 // loop_header
      %s14 = sphi 0, %s18
      %p15 = scmp.ge.s32.totalorder %s14, 4
      %s21 = sphi 0, %s33
      %s22 = sphi 0, %s29
      %s23 = sphi 0, %s21
      %s24 = sphi 0, %s22
      %s25 = sphi 0, %s23
      %s26 = sphi 0, %s24
      %s36 = sphi 0, %s38
      %s39 = sphi 0, %s36
      %s40 = sphi 0, %s39
      %s56 = sphi 0, %s40
      %s64 = sphi 0, %s66
      %s67 = sphi 0, %s64
      %s68 = sphi 0, %s67
      %s84 = sphi 0, %s68
      %s92 = sphi 0, %s94
      %s95 = sphi 0, %s92
      %s96 = sphi 0, %s95
      %s112 = sphi 0, %s96
    $region4: #{tpu_custom_call.1} parent=1 // loop_header_branch
      %17 = sbr.rel (%p15) target = $region8
    $region5: #{tpu_custom_call.1} parent=1 // loop_body
      %s19 = ssub.s32 %s14, 1
      %s20 = ssub.s32 %s14, 2
      %s27 = sadd.s32 1, %s22
      %p28 = scmp.ge.s32.totalorder %s27, 1
      %s29 = scalar_select %p28, 0, %s27
      %s30 = sadd.s32 1, %s21
      %s31 = scalar_select %p28, %s30, %s21
      %p32 = scmp.ge.s32.totalorder %s31, 2
      %s33 = scalar_select %p32, 0, %s31
      %s34 = ssub.s32 %s21, %s33
      %p35 = scmp.eq.s32.totalorder %s34, 0
      %s37 = sadd.s32 %s36, 1
      %s38 = scalar_select %p35, %s36, %s37
      %p41 = pneg %p35
      %p42 = scmp.eq.s32.totalorder %s14, 1
      %p43 = por %p41, %p42
      %p44 = scmp.ne.s32.totalorder %s36, %s39
      %p45 = scmp.eq.s32.totalorder %s14, 0
      %p46 = por %p44, %p45
      %p47 = scmp.ne.s32.totalorder %s36, %s39
      %p48 = scmp.eq.s32.totalorder %s19, 1
      %p49 = por %p47, %p48
      %p50 = scmp.ne.s32.totalorder %s39, %s40
      %p51 = scmp.eq.s32.totalorder %s19, 0
      %p52 = por %p50, %p51
      %p53 = scmp.ne.s32.totalorder %s39, %s40
      %p54 = scmp.eq.s32.totalorder %s20, 1
      %p55 = por %p53, %p54
      %p57 = scmp.ne.s32.totalorder %s40, %s56
      %p58 = scmp.eq.s32.totalorder %s20, 0
      %p59 = por %p57, %p58
      %s60 = ssub.s32 %s21, %s33
      %s61 = ssub.s32 %s22, %s29
      %s62 = sor.u32 %s60, %s61
      %p63 = scmp.eq.s32.totalorder %s62, 0
      %s65 = sadd.s32 %s64, 1
      %s66 = scalar_select %p63, %s64, %s65
      %p69 = pneg %p63
      %p70 = scmp.eq.s32.totalorder %s14, 1
      %p71 = por %p69, %p70
      %p72 = scmp.ne.s32.totalorder %s64, %s67
      %p73 = scmp.eq.s32.totalorder %s14, 0
      %p74 = por %p72, %p73
      %p75 = scmp.ne.s32.totalorder %s64, %s67
      %p76 = scmp.eq.s32.totalorder %s19, 1
      %p77 = por %p75, %p76
      %p78 = scmp.ne.s32.totalorder %s67, %s68
      %p79 = scmp.eq.s32.totalorder %s19, 0
      %p80 = por %p78, %p79
      %p81 = scmp.ne.s32.totalorder %s67, %s68
      %p82 = scmp.eq.s32.totalorder %s20, 1
      %p83 = por %p81, %p82
      %p85 = scmp.ne.s32.totalorder %s68, %s84
      %p86 = scmp.eq.s32.totalorder %s20, 0
      %p87 = por %p85, %p86
      %s88 = ssub.s32 %s21, %s33
      %s89 = ssub.s32 %s22, %s29
      %s90 = sor.u32 %s88, %s89
      %p91 = scmp.eq.s32.totalorder %s90, 0
      %s93 = sadd.s32 %s92, 1
      %s94 = scalar_select %p91, %s92, %s93
      %p97 = pneg %p91
      %p98 = scmp.eq.s32.totalorder %s14, 1
      %p99 = por %p97, %p98
      %p100 = scmp.ne.s32.totalorder %s92, %s95
      %p101 = scmp.eq.s32.totalorder %s14, 0
      %p102 = por %p100, %p101
      %p103 = scmp.ne.s32.totalorder %s92, %s95
      %p104 = scmp.eq.s32.totalorder %s19, 1
      %p105 = por %p103, %p104
      %p106 = scmp.ne.s32.totalorder %s95, %s96
      %p107 = scmp.eq.s32.totalorder %s19, 0
      %p108 = por %p106, %p107
      %p109 = scmp.ne.s32.totalorder %s95, %s96
      %p110 = scmp.eq.s32.totalorder %s20, 1
      %p111 = por %p109, %p110
      %p113 = scmp.ne.s32.totalorder %s96, %s112
      %p114 = scmp.eq.s32.totalorder %s20, 0
      %p115 = por %p113, %p114
      %p116 = scmp.le.s32.totalorder 1, %s14
      %p117 = scmp.lt.s32.totalorder %s14, 3
      %p118 = pnand %p116, %p117
      %p119 = pneg %p118
      // Predicated region
      $region9: #{tpu_custom_call.1} parent=5 // pred_check
        _
      $region10: #{tpu_custom_call.1} parent=5 // pred_check_branch
        %121 = sbr.rel (%p118) target = $region12
      $region11: #{tpu_custom_call.1} parent=5 // pred_region
        %s122 = ssub.s32 %s14, 1
      $region12: #{tpu_custom_call.1} parent=5 // pred_fallthru
        _
      %p123 = scmp.lt.s32.totalorder %s14, 2
      // Predicated region
      $region13: #{tpu_custom_call.1} parent=5 // pred_check
        %p124 = pneg %p123
      $region14: #{tpu_custom_call.1} parent=5 // pred_check_branch
        %126 = sbr.rel (%p124) target = $region16
      $region15: #{tpu_custom_call.1} parent=5 // pred_region
        // Predicated region
        $region17: #{tpu_custom_call.1} parent=15 // pred_check
          %p127 = pneg %p46
        $region18: #{tpu_custom_call.1} parent=15 // pred_check_branch
          %129 = sbr.rel (%p127) target = $region20
        $region19: #{tpu_custom_call.1} parent=15 // pred_region
          %p130 = scmp.lt.s32.totalorder %s21, 1
          %s131 = scalar_select %p130, %s21, 1
          %s132 = smul.addr %s131, 4
          %s133 = scalar_lea.vmem %s0, %s132
        $region20: #{tpu_custom_call.1} parent=15 // pred_fallthru
          _
        // Predicated region
        $region21: #{tpu_custom_call.1} parent=15 // pred_check
          %p134 = pneg %p74
        $region22: #{tpu_custom_call.1} parent=15 // pred_check_branch
          %136 = sbr.rel (%p134) target = $region24
        $region23: #{tpu_custom_call.1} parent=15 // pred_region
          %s137 = sand.u32 %s64, 1
          %s138 = scalar_lea.sflag [#allocation3], %s137
          %s139 = sand.u32 %s64, 1
          %s140 = smul.addr %s139, 8
          %s141 = scalar_lea.vmem [#allocation2], %s140
          %143 = vsyncadd %s138, 0
          %s144 = sadd.s32 %s22, %s21
          %s145 = smul.addr %s144, 8
          %s146 = scalar_lea.hbm %s1, %s145
          %s148 = sshll.u32 %s146, 4
          %s149 = int_to_ptr.hbm [resolvable:$true] %s148
          %s150 = sshll.u32 %s141, 4
          %s151 = int_to_ptr.vmem [resolvable:$true] %s150
          %153 = dma.hbm_to_vmem [thread:$0]  %s149, 128, %s151, %s138
        $region24: #{tpu_custom_call.1} parent=15 // pred_fallthru
          _
      $region16: #{tpu_custom_call.1} parent=5 // pred_fallthru
        _
      %p154 = scmp.le.s32.totalorder 1, %s14
      %p155 = scmp.lt.s32.totalorder %s14, 3
      %p156 = pnand %p154, %p155
      %p157 = pneg %p156
      // Predicated region
      $region25: #{tpu_custom_call.1} parent=5 // pred_check
        _
      $region26: #{tpu_custom_call.1} parent=5 // pred_check_branch
        %159 = sbr.rel (%p156) target = $region28
      $region27: #{tpu_custom_call.1} parent=5 // pred_region
        %s160 = ssub.s32 %s14, 1
        %s161 = sand.u32 %s67, 1
        %s162 = scalar_lea.sflag [#allocation3], %s161
        %s163 = sand.u32 %s67, 1
        %s164 = smul.addr %s163, 8
        %s165 = scalar_lea.vmem [#allocation2], %s164
        // Predicated region
        $region29: #{tpu_custom_call.1} parent=27 // pred_check
          %p166 = pneg %p80
        $region30: #{tpu_custom_call.1} parent=27 // pred_check_branch
          %168 = sbr.rel (%p166) target = $region32
        $region31: #{tpu_custom_call.1} parent=27 // pred_region
          %170 = dma.done %s162, 128
        $region32: #{tpu_custom_call.1} parent=27 // pred_fallthru
          _
        %p171 = scmp.lt.s32.totalorder %s23, 1
        %s172 = scalar_select %p171, %s23, 1
        %s173 = smul.addr %s172, 4
        %s174 = scalar_lea.vmem %s0, %s173
        %p175 = pneg %p52
        %p176 = pneg %p49
        %s177 = sand.u32 %s67, 1
        %s178 = scalar_lea.sflag [#allocation3], %s177
        %s179 = sand.u32 %s67, 1
        %s180 = smul.addr %s179, 8
        %s181 = scalar_lea.vmem [#allocation2], %s180
        %p182 = pneg %p80
        %p183 = pneg %p77
        %p184 = pneg %p108
        %p185 = pneg %p105
        %s186 = sand.u32 %s95, 1
        %s187 = scalar_lea.sflag [#allocation4], %s186
        %s188 = sand.u32 %s95, 1
        %s189 = smul.addr %s188, 8
        %s190 = scalar_lea.vmem [#allocation5], %s189
        %p191 = scmp.lt.s32.totalorder %s23, 1
        %s192 = scalar_select %p191, %s23, 1
        %s193 = smul.addr %s192, 4
        %s194 = scalar_lea.vmem %s0, %s193
        %v195 = vld [vmem:[%s194] sm:$0x1]
        %v196 = vld [vmem:[%s194 + $0x1] sm:$0x1]
        %v197 = vld [vmem:[%s194 + $0x2] sm:$0x1]
        %v198 = vld [vmem:[%s165] sm:$0xff]
        %v199 = vsub.f32 0.0, %v195
        %v200 = vperm.slane %v199, 0
        %v201 = vmax.f32 %v200, %v198
        %v202 = vperm.slane %v195, 0
        %v203 = vmin.f32 %v202, %v201
        %v204 = vperm.slane %v196, 0
        %v205 = vmul.f32 %v203, %v204
        %v206 = vround.ne.pseudo %v205
        %v207 = vperm.slane %v197, 0
        %v208 = vmul.f32 %v206, %v207
        %209 = vst [vmem:[%s190] sm:$0xff] %v208
        %s210 = sand.u32 %s95, 1
        %s211 = scalar_lea.sflag [#allocation4], %s210
        %s212 = sand.u32 %s95, 1
        %s213 = smul.addr %s212, 8
        %s214 = scalar_lea.vmem [#allocation5], %s213
        // Predicated region
        $region33: #{tpu_custom_call.1} parent=27 // pred_check
          %p215 = pneg %p105
        $region34: #{tpu_custom_call.1} parent=27 // pred_check_branch
          %217 = sbr.rel (%p215) target = $region36
        $region35: #{tpu_custom_call.1} parent=27 // pred_region
          %219 = vsyncadd %s211, 0
          %s220 = sadd.s32 %s24, %s23
          %s221 = smul.addr %s220, 8
          %s222 = scalar_lea.hbm %s2, %s221
          %s224 = sshll.u32 %s214, 4
          %s225 = int_to_ptr.vmem [resolvable:$true] %s224
          %s226 = sshll.u32 %s222, 4
          %s227 = int_to_ptr.hbm [resolvable:$true] %s226
          %229 = dma.vmem_to_hbm [thread:$0]  %s225, 128, %s227, %s211
        $region36: #{tpu_custom_call.1} parent=27 // pred_fallthru
          _
      $region28: #{tpu_custom_call.1} parent=5 // pred_fallthru
        _
      %p230 = scmp.le.s32.totalorder 2, %s14
      // Predicated region
      $region37: #{tpu_custom_call.1} parent=5 // pred_check
        %p231 = pneg %p230
      $region38: #{tpu_custom_call.1} parent=5 // pred_check_branch
        %233 = sbr.rel (%p231) target = $region40
      $region39: #{tpu_custom_call.1} parent=5 // pred_region
        %s234 = ssub.s32 %s14, 2
        // Predicated region
        $region41: #{tpu_custom_call.1} parent=39 // pred_check
          %p235 = pneg %p111
        $region42: #{tpu_custom_call.1} parent=39 // pred_check_branch
          %237 = sbr.rel (%p235) target = $region44
        $region43: #{tpu_custom_call.1} parent=39 // pred_region
          %s238 = sand.u32 %s96, 1
          %s239 = scalar_lea.sflag [#allocation4], %s238
          %s240 = sand.u32 %s96, 1
          %s241 = smul.addr %s240, 8
          %s242 = scalar_lea.vmem [#allocation5], %s241
          %244 = dma.done %s239, 128
        $region44: #{tpu_custom_call.1} parent=39 // pred_fallthru
          _
      $region40: #{tpu_custom_call.1} parent=5 // pred_fallthru
        _
    $region6: #{tpu_custom_call.1} parent=1 // loop_footer
      %s18 = sadd.s32 1, %s14
    $region7: #{tpu_custom_call.1} parent=1 // loop_footer_branch
      %13 = sbr.rel target = $region3
    $region8: #{tpu_custom_call.1} parent=1 // loop_exit
      _
    %245 = vsyncpa [#allocation3], 1
    %s246 = scalar_lea.sflag [#allocation3], 1
    %247 = vsyncpa %s246, 1
    %248 = vsyncpa [#allocation4], 1
    %s249 = scalar_lea.sflag [#allocation4], 1
    %250 = vsyncpa %s249, 1

</llo_original>
